<compile_context>
chip_gen: v7x
topology: tpu7x:2x2x1
jax: 0.10.0
libtpu: 0.0.40
codegen_flags: <defaults>
</compile_context>

<pallas_src>
import jax
import jax.numpy as jnp
from jax.experimental import pallas as pl
from jax.experimental.pallas import tpu as pltpu

_LANE = 128
_SUBLANE = 8


def _round_up(n, m):
    return ((n + m - 1) // m) * m


def _chip_caps():
    """Best-effort query of per-TensorCore VMEM capacity and TC count."""
    vmem_bytes = 64 * 1024 * 1024  # conservative (v7x-sized) fallback
    num_tc = 1
    try:
        info = pltpu.get_tpu_info()
        vmem_bytes = int(getattr(info, "vmem_capacity_bytes", vmem_bytes))
    except Exception:
        pass
    try:
        kind = jax.devices()[0].device_kind.lower()
        if "v7" in kind:  # v7x: 2 TensorCores per chip; v5e/v6e: 1
            num_tc = 2
    except Exception:
        pass
    return vmem_bytes, num_tc


def _split_eval_kernel(x_ref, w_ref, b_ref, o_ref):
    # One grid step == one batch tile of f(x) = x @ W + b (row-wise map, so
    # garbage rows in a clipped ragged block never touch valid output rows).
    acc = jnp.dot(x_ref[...], w_ref[...], preferred_element_type=jnp.float32)
    o_ref[...] = (acc + b_ref[...]).astype(o_ref.dtype)


def split_eval(x, w, b, size, *, tile_m=None, cast_inputs_to_bf16=False):
    """Pallas implementation of SplitEval(f=linear(W, b), size=size)(x).

    `size` is accepted for API parity with the PyTorch module; since f is a
    row-wise linear map the result is independent of the chunking, so the
    kernel picks its own TPU-efficient batch tile (or uses `tile_m` if given).
    """
    del size  # chunking does not change the math for a row-wise f

    B, D = x.shape
    Dw, C = w.shape
    assert D == Dw
    b = b.reshape(1, C)

    if cast_inputs_to_bf16:
        # Opt-in: halves HBM read traffic on the dominant x stream; f32 accum.
        x = x.astype(jnp.bfloat16)
        w = w.astype(jnp.bfloat16)
    x_item = x.dtype.itemsize
    w_item = w.dtype.itemsize

    # --- Generation-aware VMEM budget ---------------------------------------
    vmem_bytes, num_tc = _chip_caps()
    budget = min(vmem_bytes * 3 // 4, 96 * 1024 * 1024)

    # Worst-case resident footprint of W + b (double-buffered) and per-row cost
    # of the pipelined x / out tiles (double-buffered each).
    fixed_worst = 2 * (D * C * w_item + C * 4)
    per_row = 2 * (D * x_item + C * 4)
    assert budget - fixed_worst >= per_row * _SUBLANE, (
        "Resident W/b exceed the VMEM budget for this (D, C); add a K "
        "(reduction) grid axis with an accumulator scratch (see TODO).")

    # --- Batch tile, decoupled from `size` ----------------------------------
    if tile_m is None:
        tile_cap = max(_SUBLANE, min(1024, (budget - fixed_worst) // per_row))
        # Only force a >=2-way split on chips with 2 TensorCores (v7x) and
        # only when each half keeps >= 512 rows.
        if num_tc >= 2 and B >= 512 * num_tc:
            tile_cap = min(tile_cap, _round_up(pl.cdiv(B, num_tc), _SUBLANE))
        if B <= tile_cap:
            tile_m = B  # one block == full array: no masking at all
        else:
            # Split as evenly as possible to minimize the ragged tail.
            n_blocks = pl.cdiv(B, tile_cap)
            tile_m = _round_up(pl.cdiv(B, n_blocks), _SUBLANE)
    else:
        tile_m = int(tile_m)
        if tile_m != B:
            tile_m = _round_up(tile_m, _SUBLANE)
    n_blocks = pl.cdiv(B, tile_m)

    def call(single_buffer_consts):
        # W/b block indices never change; a second pipeline buffer is wasted
        # VMEM, so request single buffering for them.
        const_kw = (dict(pipeline_mode=pl.Buffered(buffer_count=1))
                    if single_buffer_consts else {})
        grid_spec = pltpu.PrefetchScalarGridSpec(
            num_scalar_prefetch=0,
            grid=(n_blocks,),
            in_specs=[
                # batch tile i: rows [i*tile_m, (i+1)*tile_m); ragged last
                # block is clipped by Pallas (no explicit jnp.pad pass).
                pl.BlockSpec((tile_m, D), lambda i: (i, 0)),
                # full weight matrix, resident for every tile
                pl.BlockSpec((D, C), lambda i: (0, 0), **const_kw),
                # bias row, resident for every tile
                pl.BlockSpec((1, C), lambda i: (0, 0), **const_kw),
            ],
            out_specs=pl.BlockSpec((tile_m, C), lambda i: (i, 0)),
        )
        return pl.pallas_call(
            _split_eval_kernel,
            out_shape=jax.ShapeDtypeStruct((B, C), jnp.float32),
            grid_spec=grid_spec,
            compiler_params=pltpu.CompilerParams(
                dimension_semantics=("parallel",),
                vmem_limit_bytes=int(budget),
            ),
            cost_estimate=pl.CostEstimate(
                flops=2 * B * D * C,
                transcendentals=0,
                bytes_accessed=(B * D * x_item + D * C * w_item
                                + C * 4 + B * C * 4),
            ),
        )(x, w, b)

    try:
        return call(single_buffer_consts=True)
    except Exception:
        # pipeline_mode single-buffering unavailable on this build; fall back
        # to the default double-buffered resident W/b (costs 2x their bytes).
        return call(single_buffer_consts=False)


if __name__ == "__main__":
    key = jax.random.PRNGKey(0)
    kx, kw, kb = jax.random.split(key, 3)

    B = 20        # total batch, NOT a multiple of `size` -> ragged last chunk
    size = 8      # SplitEval chunk size -> chunks of 8, 8, 4
    D = 32        # feature dim
    C = 16        # number of classes (multiclass head)

    x = jax.random.normal(kx, (B, D), dtype=jnp.float32)
    w = jax.random.normal(kw, (D, C), dtype=jnp.float32) * 0.1
    b = jax.random.normal(kb, (1, C), dtype=jnp.float32) * 0.1

    # Reference: explicit chunked evaluation + concatenation (SplitEval).
    ref = jnp.concatenate(
        [x[i:i + size] @ w + b for i in range(0, B, size)], axis=0
    )

    # Default path: whole batch fits one block (block == full array, no mask).
    out = jax.block_until_ready(split_eval(x, w, b, size))
    assert out.shape == (B, C) and out.dtype == jnp.float32
    assert jnp.allclose(out, ref, atol=1e-5, rtol=1e-5)

    # Forced small tile: 3 blocks with a ragged last block (4 valid rows) to
    # exercise the no-pad ragged-block clipping / masked writeback path.
    out_ragged = jax.block_until_ready(split_eval(x, w, b, size, tile_m=8))
    assert jnp.allclose(out_ragged, ref, atol=1e-5, rtol=1e-5)

    print("KERNEL_OK")
</pallas_src>

<mosaic_0001>
module attributes {stable_mosaic.version = 11 : i64} {
  func.func @_split_eval_kernel(%arg0: i32, %arg1: memref<20x32xf32, #tpu.memory_space<vmem>>, %arg2: memref<32x16xf32, #tpu.memory_space<vmem>>, %arg3: memref<1x16xf32, #tpu.memory_space<vmem>>, %arg4: memref<20x16xf32, #tpu.memory_space<vmem>>) attributes {dimension_semantics = [#tpu.dimension_semantics<parallel>], iteration_bounds = array<i64: 1>, scalar_prefetch = 0 : i64, scratch_operands = 0 : i64, tpu.core_type = #tpu.core_type<tc>, window_params = [{transform_indices = @transform_0, window_bounds = array<i64: 20, 32>}, {pipeline_mode = #tpu.pipeline_mode<synchronous>, transform_indices = @transform_1, window_bounds = array<i64: 32, 16>}, {pipeline_mode = #tpu.pipeline_mode<synchronous>, transform_indices = @transform_2, window_bounds = array<i64: 1, 16>}, {transform_indices = @transform_3, window_bounds = array<i64: 20, 16>}]} {
    %c0 = arith.constant 0 : index
    %c0_0 = arith.constant 0 : index
    %0 = vector.load %arg1[%c0, %c0_0] : memref<20x32xf32, #tpu.memory_space<vmem>>, vector<20x32xf32>
    %c0_1 = arith.constant 0 : index
    %c0_2 = arith.constant 0 : index
    %1 = vector.load %arg2[%c0_1, %c0_2] : memref<32x16xf32, #tpu.memory_space<vmem>>, vector<32x16xf32>
    %cst = arith.constant dense<0.000000e+00> : vector<20x16xf32>
    %2 = tpu.matmul %0, %1, %cst {dimension_numbers = #tpu.dot_dimension_numbers<[1], [0], [0], [1], [0, 0, 1, 1], [], []>} : vector<20x32xf32>, vector<32x16xf32>, vector<20x16xf32> -> vector<20x16xf32>
    %c0_3 = arith.constant 0 : index
    %c0_4 = arith.constant 0 : index
    %3 = vector.load %arg3[%c0_3, %c0_4] : memref<1x16xf32, #tpu.memory_space<vmem>>, vector<1x16xf32>
    %4 = vector.broadcast %3 : vector<1x16xf32> to vector<20x16xf32>
    %5 = arith.addf %2, %4 : vector<20x16xf32>
    %c0_5 = arith.constant 0 : index
    %c0_6 = arith.constant 0 : index
    %6 = vector.load %arg4[%c0_5, %c0_6] : memref<20x16xf32, #tpu.memory_space<vmem>>, vector<20x16xf32>
    tpu.vector_store %arg4[%c0_5, %c0_6], %5 {strides = array<i32>} : memref<20x16xf32, #tpu.memory_space<vmem>>, vector<20x16xf32>,
    return
  }
  func.func @transform_0(%arg0: i32) -> (i32, i32) {
    %c0_i32 = arith.constant 0 : i32
    %c0_i32_0 = arith.constant 0 : i32
    return %arg0, %c0_i32 : i32, i32
  }
  func.func @transform_1(%arg0: i32) -> (i32, i32) {
    %c0_i32 = arith.constant 0 : i32
    %c0_i32_0 = arith.constant 0 : i32
    %c0_i32_1 = arith.constant 0 : i32
    return %c0_i32, %c0_i32_0 : i32, i32
  }
  func.func @transform_2(%arg0: i32) -> (i32, i32) {
    %c0_i32 = arith.constant 0 : i32
    %c0_i32_0 = arith.constant 0 : i32
    %c0_i32_1 = arith.constant 0 : i32
    return %c0_i32, %c0_i32_0 : i32, i32
  }
  func.func @transform_3(%arg0: i32) -> (i32, i32) {
    %c0_i32 = arith.constant 0 : i32
    %c0_i32_0 = arith.constant 0 : i32
    return %arg0, %c0_i32 : i32, i32
  }
}

module attributes {stable_mosaic.version = 11 : i64} {
  func.func @_split_eval_kernel(%arg0: i32, %arg1: memref<20x32xf32, #tpu.memory_space<vmem>>, %arg2: memref<32x16xf32, #tpu.memory_space<vmem>>, %arg3: memref<1x16xf32, #tpu.memory_space<vmem>>, %arg4: memref<20x16xf32, #tpu.memory_space<vmem>>) attributes {dimension_semantics = [#tpu.dimension_semantics<parallel>], iteration_bounds = array<i64: 1>, scalar_prefetch = 0 : i64, scratch_operands = 0 : i64, tpu.core_type = #tpu.core_type<tc>, window_params = [{transform_indices = @transform_0, window_bounds = array<i64: 20, 32>}, {pipeline_mode = #tpu.pipeline_mode<synchronous>, transform_indices = @transform_1, window_bounds = array<i64: 32, 16>}, {pipeline_mode = #tpu.pipeline_mode<synchronous>, transform_indices = @transform_2, window_bounds = array<i64: 1, 16>}, {transform_indices = @transform_3, window_bounds = array<i64: 20, 16>}]} {
    %c0 = arith.constant 0 : index
    %c0_0 = arith.constant 0 : index
    %0 = vector.load %arg1[%c0, %c0_0] : memref<20x32xf32, #tpu.memory_space<vmem>>, vector<20x32xf32>
    %c0_1 = arith.constant 0 : index
    %c0_2 = arith.constant 0 : index
    %1 = vector.load %arg2[%c0_1, %c0_2] : memref<32x16xf32, #tpu.memory_space<vmem>>, vector<32x16xf32>
    %cst = arith.constant dense<0.000000e+00> : vector<20x16xf32>
    %2 = tpu.matmul %0, %1, %cst {dimension_numbers = #tpu.dot_dimension_numbers<[1], [0], [0], [1], [0, 0, 1, 1], [], []>} : vector<20x32xf32>, vector<32x16xf32>, vector<20x16xf32> -> vector<20x16xf32>
    %c0_3 = arith.constant 0 : index
    %c0_4 = arith.constant 0 : index
    %3 = vector.load %arg3[%c0_3, %c0_4] : memref<1x16xf32, #tpu.memory_space<vmem>>, vector<1x16xf32>
    %4 = vector.broadcast %3 : vector<1x16xf32> to vector<20x16xf32>
    %5 = arith.addf %2, %4 : vector<20x16xf32>
    %c0_5 = arith.constant 0 : index
    %c0_6 = arith.constant 0 : index
    %6 = vector.load %arg4[%c0_5, %c0_6] : memref<20x16xf32, #tpu.memory_space<vmem>>, vector<20x16xf32>
    tpu.vector_store %arg4[%c0_5, %c0_6], %5 {strides = array<i32>} : memref<20x16xf32, #tpu.memory_space<vmem>>, vector<20x16xf32>,
    return
  }
  func.func @transform_0(%arg0: i32) -> (i32, i32) {
    %c0_i32 = arith.constant 0 : i32
    %c0_i32_0 = arith.constant 0 : i32
    return %arg0, %c0_i32 : i32, i32
  }
  func.func @transform_1(%arg0: i32) -> (i32, i32) {
    %c0_i32 = arith.constant 0 : i32
    %c0_i32_0 = arith.constant 0 : i32
    %c0_i32_1 = arith.constant 0 : i32
    return %c0_i32, %c0_i32_0 : i32, i32
  }
  func.func @transform_2(%arg0: i32) -> (i32, i32) {
    %c0_i32 = arith.constant 0 : i32
    %c0_i32_0 = arith.constant 0 : i32
    %c0_i32_1 = arith.constant 0 : i32
    return %c0_i32, %c0_i32_0 : i32, i32
  }
  func.func @transform_3(%arg0: i32) -> (i32, i32) {
    %c0_i32 = arith.constant 0 : i32
    %c0_i32_0 = arith.constant 0 : i32
    return %arg0, %c0_i32 : i32, i32
  }
}

</mosaic_0001>

<llo_original>
// kernel: tpu_custom_call.1
$region0: #{tpu_custom_call.1}
  #allocation0 [shape = 'u32[]', space=smem, size = 0x4, offset = 0x4, fixed_abs, tag = 'smem constant byte address 0x4 - core index']
  #allocation1 [shape = 'u32[144,128]{1,0:T(1,128)}', space=vmem, size = 0x12000, scoped, tag = 'internal scratch']
  %s0 = inlined_call_operand.vmem [shape: f32[20,32], index: 0, kind: input, shape index: {}]
  %s1 = inlined_call_operand.vmem [shape: f32[32,16], index: 1, kind: input, shape index: {}]
  %s2 = inlined_call_operand.vmem [shape: f32[1,16], index: 2, kind: input, shape index: {}]
  %s3 = inlined_call_operand.vmem [shape: f32[20,16], index: 3, kind: output, shape index: {}]
  %s4 = sld [smem:[#allocation0]]
  $region22: #{tpu_custom_call.1} parent=0
    _
  %s6 = ssub.s32 1, %s4
  %s7 = scalar_select 0, %s6, %s4
  // Predicated region
  $region2: #{tpu_custom_call.1} parent=0 // pred_check
    _
  $region3: #{tpu_custom_call.1} parent=0 // pred_check_branch
    %9 = sbr.rel (0) target = $region5
  $region4: #{tpu_custom_call.1} parent=0 // pred_region
    _
  $region5: #{tpu_custom_call.1} parent=0 // pred_fallthru
    _
  // Predicated region
  $region6: #{tpu_custom_call.1} parent=0 // pred_check
    _
  $region7: #{tpu_custom_call.1} parent=0 // pred_check_branch
    %11 = sbr.rel (0) target = $region9
  $region8: #{tpu_custom_call.1} parent=0 // pred_region
    _
  $region9: #{tpu_custom_call.1} parent=0 // pred_fallthru
    _
  // Predicated region
  $region10: #{tpu_custom_call.1} parent=0 // pred_check
    _
  $region11: #{tpu_custom_call.1} parent=0 // pred_check_branch
    %13 = sbr.rel (0) target = $region13
  $region12: #{tpu_custom_call.1} parent=0 // pred_region
    _
  $region13: #{tpu_custom_call.1} parent=0 // pred_fallthru
    _
  %v14 = vld [vmem:[%s0] sm:$0xff]
  %v15 = vld [vmem:[%s0 + $0x8] sm:$0xff]
  %v16 = vld [vmem:[%s0 + $0x10] sm:$0xf]
  %v17 = vld [vmem:[%s1] sm:$0xff]
  %v18 = vld [vmem:[%s1 + $0x8] sm:$0xff]
  %v19 = vld [vmem:[%s1 + $0x10] sm:$0xff]
  %v20 = vld [vmem:[%s1 + $0x18] sm:$0xff]
  %v21 = vld [vmem:[%s2] sm:$0x1]
  %v23 = vlaneseq
  %v24 = vshrl.u32 %v23, 7
  %v25 = vsub.s32 0, %v24
  %v26 = vrot.slane %v21, %v25
  %vm28 = vcmask 261120
  %v30 = vsel %vm28, %v14, 0
  %v33 = vsel %vm28, %v15, 0
  %v36 = vsel %vm28, %v16, 0
  %38 = vmatprep.subr.mxu0 0.0
  %39 = vmatpush1.msra.mxu0 %v17
  %40 = vmatprep.subr.mxu0 0.0
  %41 = vmatpush1.msra.mxu0 %v18
  %42 = vmatprep.subr.mxu0 0.0
  %43 = vmatpush1.msra.mxu0 %v19
  %44 = vmatprep.subr.mxu0 0.0
  %45 = vmatpush1.msra.mxu0 %v20
  %46 = vmatprep.subr.mxu0 0.0
  %47 = vmatpush1.msra.mxu0 0.0
  %48 = vmatprep.subr.mxu0 0.0
  %49 = vmatpush1.msra.mxu0 0.0
  %50 = vmatprep.subr.mxu0 0.0
  %51 = vmatpush1.msra.mxu0 0.0
  %52 = vmatprep.subr.mxu0 0.0
  %53 = vmatpush1.msra.mxu0 0.0
  %54 = vmatprep.subr.mxu0 0.0
  %55 = vmatpush1.msra.mxu0 0.0
  %56 = vmatprep.subr.mxu0 0.0
  %57 = vmatpush1.msra.mxu0 0.0
  %58 = vmatprep.subr.mxu0 0.0
  %59 = vmatpush1.msra.mxu0 0.0
  %60 = vmatprep.subr.mxu0 0.0
  %61 = vmatpush1.msra.mxu0 0.0
  %62 = vmatprep.subr.mxu0 0.0
  %63 = vmatpush1.msra.mxu0 0.0
  %64 = vmatprep.subr.mxu0 0.0
  %65 = vmatpush1.msra.mxu0 0.0
  %66 = vmatprep.subr.mxu0 0.0
  %67 = vmatpush1.msra.mxu0 0.0
  %68 = vmatprep.subr.mxu0 0.0
  %69 = vmatpush1.msra.mxu0 0.0
  %70 = vmatprep.subr.mxu0 0.0
  %71 = vmatpush1.msra.mxu0 0.0
  %72 = vmatprep.subr.mxu0 0.0
  %73 = vmatpush1.msra.mxu0 0.0
  %74 = vmatprep.subr.mxu0 0.0
  %75 = vmatpush1.msra.mxu0 0.0
  %76 = vmatprep.subr.mxu0 0.0
  %77 = vmatpush1.msra.mxu0 0.0
  %78 = vmatprep.subr.mxu0 0.0
  %79 = vmatpush1.msra.mxu0 0.0
  %80 = vmatprep.subr.mxu0 0.0
  %81 = vmatpush1.msra.mxu0 0.0
  %82 = vmatprep.subr.mxu0 0.0
  %83 = vmatpush1.msra.mxu0 0.0
  %84 = vmatprep.subr.mxu0 0.0
  %85 = vmatpush1.msra.mxu0 0.0
  %86 = vmatprep.subr.mxu0 0.0
  %87 = vmatpush1.msra.mxu0 0.0
  %88 = vmatprep.subr.mxu0 0.0
  %89 = vmatpush1.msra.mxu0 0.0
  %90 = vmatprep.subr.mxu0 0.0
  %91 = vmatpush1.msra.mxu0 0.0
  %92 = vmatprep.subr.mxu0 0.0
  %93 = vmatpush1.msra.mxu0 0.0
  %94 = vmatprep.subr.mxu0 0.0
  %95 = vmatpush1.msra.mxu0 0.0
  %96 = vmatprep.subr.mxu0 0.0
  %97 = vmatpush1.msra.mxu0 0.0
  %98 = vmatprep.subr.mxu0 0.0
  %99 = vmatpush1.msra.mxu0 0.0
  %100 = vmatprep.subr.mxu0 0.0
  %101 = vmatpush1.msra.mxu0 0.0
  %102 = vmatprep.mubr.f32.mxu0 0.0
  %103 = vmatmul.mubr.f32.gmra.mrb[0].mxu0 %v30
  %v104 = vpop.f32.mrb[0].mxu0
  %v105 = vadd.f32 %v26, %v104
  %v106 = vpop.f32.mrb[0].mxu0
  %107 = vmatprep.mubr.f32.mxu0 0.0
  %108 = vmatmul.mubr.f32.gmra.mrb[0].mxu0 %v33
  %v109 = vpop.f32.mrb[0].mxu0
  %v110 = vadd.f32 %v26, %v109
  %v111 = vpop.f32.mrb[0].mxu0
  %112 = vmatprep.mubr.f32.mxu0 0.0
  %113 = vmatmul.mubr.f32.gmra.mrb[0].mxu0 %v36
  %v114 = vpop.f32.mrb[0].mxu0
  %v115 = vadd.f32 %v26, %v114
  %v116 = vpop.f32.mrb[0].mxu0
  %117 = vdwg.mxu0
  %vm118 = vcmask 130048
  %119 = vst.msk [vmem:[%s3] sm:$0xff] %vm118, %v105
  %120 = vst.msk [vmem:[%s3 + $0x8] sm:$0xff] %vm118, %v110
  %vm121 = vcmask 125952
  %122 = vst.msk [vmem:[%s3 + $0x10] sm:$0xf] %vm121, %v115
  // Predicated region
  $region14: #{tpu_custom_call.1} parent=0 // pred_check
    _
  $region15: #{tpu_custom_call.1} parent=0 // pred_check_branch
    %124 = sbr.rel (0) target = $region17
  $region16: #{tpu_custom_call.1} parent=0 // pred_region
    _
  $region17: #{tpu_custom_call.1} parent=0 // pred_fallthru
    _
  // Predicated region
  $region18: #{tpu_custom_call.1} parent=0 // pred_check
    _
  $region19: #{tpu_custom_call.1} parent=0 // pred_check_branch
    %126 = sbr.rel (0) target = $region21
  $region20: #{tpu_custom_call.1} parent=0 // pred_region
    _
  $region21: #{tpu_custom_call.1} parent=0 // pred_fallthru
    _

// kernel: tpu_custom_call.1
$region0: #{tpu_custom_call.1}
  #allocation0 [shape = 'u32[]', space=smem, size = 0x4, offset = 0x4, fixed_abs, tag = 'smem constant byte address 0x4 - core index']
  #allocation1 [shape = 'u32[144,128]{1,0:T(1,128)}', space=vmem, size = 0x12000, scoped, tag = 'internal scratch']
  %s0 = inlined_call_operand.vmem [shape: f32[20,32], index: 0, kind: input, shape index: {}]
  %s1 = inlined_call_operand.vmem [shape: f32[32,16], index: 1, kind: input, shape index: {}]
  %s2 = inlined_call_operand.vmem [shape: f32[1,16], index: 2, kind: input, shape index: {}]
  %s3 = inlined_call_operand.vmem [shape: f32[20,16], index: 3, kind: output, shape index: {}]
  %s4 = sld [smem:[#allocation0]]
  $region22: #{tpu_custom_call.1} parent=0
    _
  %s6 = ssub.s32 1, %s4
  %s7 = scalar_select 0, %s6, %s4
  // Predicated region
  $region2: #{tpu_custom_call.1} parent=0 // pred_check
    _
  $region3: #{tpu_custom_call.1} parent=0 // pred_check_branch
    %9 = sbr.rel (0) target = $region5
  $region4: #{tpu_custom_call.1} parent=0 // pred_region
    _
  $region5: #{tpu_custom_call.1} parent=0 // pred_fallthru
    _
  // Predicated region
  $region6: #{tpu_custom_call.1} parent=0 // pred_check
    _
  $region7: #{tpu_custom_call.1} parent=0 // pred_check_branch
    %11 = sbr.rel (0) target = $region9
  $region8: #{tpu_custom_call.1} parent=0 // pred_region
    _
  $region9: #{tpu_custom_call.1} parent=0 // pred_fallthru
    _
  // Predicated region
  $region10: #{tpu_custom_call.1} parent=0 // pred_check
    _
  $region11: #{tpu_custom_call.1} parent=0 // pred_check_branch
    %13 = sbr.rel (0) target = $region13
  $region12: #{tpu_custom_call.1} parent=0 // pred_region
    _
  $region13: #{tpu_custom_call.1} parent=0 // pred_fallthru
    _
  %v14 = vld [vmem:[%s0] sm:$0xff]
  %v15 = vld [vmem:[%s0 + $0x8] sm:$0xff]
  %v16 = vld [vmem:[%s0 + $0x10] sm:$0xf]
  %v17 = vld [vmem:[%s1] sm:$0xff]
  %v18 = vld [vmem:[%s1 + $0x8] sm:$0xff]
  %v19 = vld [vmem:[%s1 + $0x10] sm:$0xff]
  %v20 = vld [vmem:[%s1 + $0x18] sm:$0xff]
  %v21 = vld [vmem:[%s2] sm:$0x1]
  %v23 = vlaneseq
  %v24 = vshrl.u32 %v23, 7
  %v25 = vsub.s32 0, %v24
  %v26 = vrot.slane %v21, %v25
  %vm28 = vcmask 261120
  %v30 = vsel %vm28, %v14, 0
  %v33 = vsel %vm28, %v15, 0
  %v36 = vsel %vm28, %v16, 0
  %38 = vmatprep.subr.mxu0 0.0
  %39 = vmatpush1.msra.mxu0 %v17
  %40 = vmatprep.subr.mxu0 0.0
  %41 = vmatpush1.msra.mxu0 %v18
  %42 = vmatprep.subr.mxu0 0.0
  %43 = vmatpush1.msra.mxu0 %v19
  %44 = vmatprep.subr.mxu0 0.0
  %45 = vmatpush1.msra.mxu0 %v20
  %46 = vmatprep.subr.mxu0 0.0
  %47 = vmatpush1.msra.mxu0 0.0
  %48 = vmatprep.subr.mxu0 0.0
  %49 = vmatpush1.msra.mxu0 0.0
  %50 = vmatprep.subr.mxu0 0.0
  %51 = vmatpush1.msra.mxu0 0.0
  %52 = vmatprep.subr.mxu0 0.0
  %53 = vmatpush1.msra.mxu0 0.0
  %54 = vmatprep.subr.mxu0 0.0
  %55 = vmatpush1.msra.mxu0 0.0
  %56 = vmatprep.subr.mxu0 0.0
  %57 = vmatpush1.msra.mxu0 0.0
  %58 = vmatprep.subr.mxu0 0.0
  %59 = vmatpush1.msra.mxu0 0.0
  %60 = vmatprep.subr.mxu0 0.0
  %61 = vmatpush1.msra.mxu0 0.0
  %62 = vmatprep.subr.mxu0 0.0
  %63 = vmatpush1.msra.mxu0 0.0
  %64 = vmatprep.subr.mxu0 0.0
  %65 = vmatpush1.msra.mxu0 0.0
  %66 = vmatprep.subr.mxu0 0.0
  %67 = vmatpush1.msra.mxu0 0.0
  %68 = vmatprep.subr.mxu0 0.0
  %69 = vmatpush1.msra.mxu0 0.0
  %70 = vmatprep.subr.mxu0 0.0
  %71 = vmatpush1.msra.mxu0 0.0
  %72 = vmatprep.subr.mxu0 0.0
  %73 = vmatpush1.msra.mxu0 0.0
  %74 = vmatprep.subr.mxu0 0.0
  %75 = vmatpush1.msra.mxu0 0.0
  %76 = vmatprep.subr.mxu0 0.0
  %77 = vmatpush1.msra.mxu0 0.0
  %78 = vmatprep.subr.mxu0 0.0
  %79 = vmatpush1.msra.mxu0 0.0
  %80 = vmatprep.subr.mxu0 0.0
  %81 = vmatpush1.msra.mxu0 0.0
  %82 = vmatprep.subr.mxu0 0.0
  %83 = vmatpush1.msra.mxu0 0.0
  %84 = vmatprep.subr.mxu0 0.0
  %85 = vmatpush1.msra.mxu0 0.0
  %86 = vmatprep.subr.mxu0 0.0
  %87 = vmatpush1.msra.mxu0 0.0
  %88 = vmatprep.subr.mxu0 0.0
  %89 = vmatpush1.msra.mxu0 0.0
  %90 = vmatprep.subr.mxu0 0.0
  %91 = vmatpush1.msra.mxu0 0.0
  %92 = vmatprep.subr.mxu0 0.0
  %93 = vmatpush1.msra.mxu0 0.0
  %94 = vmatprep.subr.mxu0 0.0
  %95 = vmatpush1.msra.mxu0 0.0
  %96 = vmatprep.subr.mxu0 0.0
  %97 = vmatpush1.msra.mxu0 0.0
  %98 = vmatprep.subr.mxu0 0.0
  %99 = vmatpush1.msra.mxu0 0.0
  %100 = vmatprep.subr.mxu0 0.0
  %101 = vmatpush1.msra.mxu0 0.0
  %102 = vmatprep.mubr.f32.mxu0 0.0
  %103 = vmatmul.mubr.f32.gmra.mrb[0].mxu0 %v30
  %v104 = vpop.f32.mrb[0].mxu0
  %v105 = vadd.f32 %v26, %v104
  %v106 = vpop.f32.mrb[0].mxu0
  %107 = vmatprep.mubr.f32.mxu0 0.0
  %108 = vmatmul.mubr.f32.gmra.mrb[0].mxu0 %v33
  %v109 = vpop.f32.mrb[0].mxu0
  %v110 = vadd.f32 %v26, %v109
  %v111 = vpop.f32.mrb[0].mxu0
  %112 = vmatprep.mubr.f32.mxu0 0.0
  %113 = vmatmul.mubr.f32.gmra.mrb[0].mxu0 %v36
  %v114 = vpop.f32.mrb[0].mxu0
  %v115 = vadd.f32 %v26, %v114
  %v116 = vpop.f32.mrb[0].mxu0
  %117 = vdwg.mxu0
  %vm118 = vcmask 130048
  %119 = vst.msk [vmem:[%s3] sm:$0xff] %vm118, %v105
  %120 = vst.msk [vmem:[%s3 + $0x8] sm:$0xff] %vm118, %v110
  %vm121 = vcmask 125952
  %122 = vst.msk [vmem:[%s3 + $0x10] sm:$0xf] %vm121, %v115
  // Predicated region
  $region14: #{tpu_custom_call.1} parent=0 // pred_check
    _
  $region15: #{tpu_custom_call.1} parent=0 // pred_check_branch
    %124 = sbr.rel (0) target = $region17
  $region16: #{tpu_custom_call.1} parent=0 // pred_region
    _
  $region17: #{tpu_custom_call.1} parent=0 // pred_fallthru
    _
  // Predicated region
  $region18: #{tpu_custom_call.1} parent=0 // pred_check
    _
  $region19: #{tpu_custom_call.1} parent=0 // pred_check_branch
    %126 = sbr.rel (0) target = $region21
  $region20: #{tpu_custom_call.1} parent=0 // pred_region
    _
  $region21: #{tpu_custom_call.1} parent=0 // pred_fallthru
    _

</llo_original>
